<compile_context>
chip_gen: v7x
topology: tpu7x:2x2x1
jax: 0.10.0
libtpu: 0.0.40
codegen_flags: <defaults>
</compile_context>

<pallas_src>
import functools

import jax
import jax.numpy as jnp
from jax import lax
from jax.experimental import pallas as pl
from jax.experimental.pallas import tpu as pltpu


def _round_up(x: int, m: int) -> int:
    return ((x + m - 1) // m) * m


# ---------------------------------------------------------------------------
# CORAL loss: streamed Gram accumulation over the batch (reduction) axis.
# ---------------------------------------------------------------------------
def _coral_kernel(s_ref, t_ref, o_ref, s_acc, t_acc, *, inv_ns, inv_nt, inv_scale):
    k = pl.program_id(0)

    @pl.when(k == 0)
    def _init():
        s_acc[...] = jnp.zeros_like(s_acc)
        t_acc[...] = jnp.zeros_like(t_acc)

    # Contract over the batch (row) axis: S^T S without materializing a transpose.
    contract = (((0,), (0,)), ((), ()))
    s = s_ref[...]   # keep caller dtype (bf16 stays bf16); f32 accumulation below
    t = t_ref[...]
    s_acc[...] += lax.dot_general(s, s, dimension_numbers=contract,
                                  preferred_element_type=jnp.float32)
    t_acc[...] += lax.dot_general(t, t, dimension_numbers=contract,
                                  preferred_element_type=jnp.float32)

    @pl.when(k == pl.num_programs(0) - 1)
    def _finalize():
        # Reciprocal multiplies (no d x d VALU divides); elementwise tail stays
        # f32 on the accumulators (v5e-friendly even with bf16 inputs).
        diff = s_acc[...] * inv_ns - t_acc[...] * inv_nt
        # Single (1,1) store, executed once per call -> off the hot path.
        o_ref[0, 0] = jnp.sum(diff * diff) * inv_scale


def coral_loss(source: jax.Array, target: jax.Array, *, row_chunk: int = 256) -> jax.Array:
    """CORAL loss between two (batch, features) arrays. Returns a scalar f32."""
    assert source.ndim == 2 and target.ndim == 2
    assert source.shape[1] == target.shape[1]
    n_src, d = source.shape
    n_tgt, _ = target.shape
    assert n_src > 1 and n_tgt > 1, "CORAL needs at least 2 rows per domain (n-1 > 0)"

    # Row chunk: multiple of 8 (sublane), never larger than the padded batch.
    chunk = max(8, min(row_chunk, _round_up(max(n_src, n_tgt), 8)))
    chunk = _round_up(chunk, 8)
    n_steps = max(pl.cdiv(n_src, chunk), pl.cdiv(n_tgt, chunk))
    padded = n_steps * chunk

    def _pad_rows(x):
        p = padded - x.shape[0]
        # Zero rows contribute nothing to X^T X, so padding is exact.
        return jnp.pad(x, ((0, p), (0, 0))) if p else x

    src_p = _pad_rows(source)
    tgt_p = _pad_rows(target)

    kernel = functools.partial(
        _coral_kernel,
        inv_ns=1.0 / (n_src - 1),
        inv_nt=1.0 / (n_tgt - 1),
        inv_scale=1.0 / (4.0 * d * d),
    )

    # VMEM budget: 2 inputs x 2 pipeline buffers x (chunk, d) + two (d, d) f32 accumulators.
    itemsize = jnp.dtype(src_p.dtype).itemsize
    vmem_needed = 2 * 2 * chunk * d * itemsize + 2 * d * d * 4
    vmem_limit = None
    if vmem_needed > 32 * 1024 * 1024:
        vmem_limit = min(int(vmem_needed * 3 // 2), 56 * 1024 * 1024)

    out = pl.pallas_call(
        kernel,
        out_shape=jax.ShapeDtypeStruct((1, 1), jnp.float32),
        grid=(n_steps,),
        in_specs=[
            pl.BlockSpec((chunk, d), lambda k: (k, 0)),
            pl.BlockSpec((chunk, d), lambda k: (k, 0)),
        ],
        out_specs=pl.BlockSpec((1, 1), lambda k: (0, 0)),
        scratch_shapes=[
            pltpu.VMEM((d, d), jnp.float32),
            pltpu.VMEM((d, d), jnp.float32),
        ],
        compiler_params=pltpu.CompilerParams(
            dimension_semantics=("arbitrary",),   # reduction axis
            vmem_limit_bytes=vmem_limit,
        ),
    )(src_p, tgt_p)
    return out[0, 0]


# ---------------------------------------------------------------------------
# Classifier head: Linear(512,256) -> ReLU -> Linear(256,10), row-tiled.
# ---------------------------------------------------------------------------
def _classifier_kernel(x_ref, w1_ref, b1_ref, w2_ref, b2_ref, o_ref):
    x = x_ref[...]
    h = jnp.dot(x, w1_ref[...], preferred_element_type=jnp.float32) + b1_ref[...]
    h = jnp.maximum(h, 0.0)
    y = jnp.dot(h.astype(w2_ref.dtype), w2_ref[...],
                preferred_element_type=jnp.float32) + b2_ref[...]
    o_ref[...] = y.astype(o_ref.dtype)


def classifier_head(x, w1, b1, w2, b2, *, row_tile: int = 128):
    n, d_in = x.shape
    d_hid = w1.shape[1]
    n_cls = w2.shape[1]
    assert w1.shape == (d_in, d_hid) and w2.shape == (d_hid, n_cls)
    assert b1.shape == (d_hid,) and b2.shape == (n_cls,)

    tile = min(_round_up(row_tile, 8), _round_up(n, 8))
    n_tiles = pl.cdiv(n, tile)
    padded = n_tiles * tile
    if padded != n:
        x = jnp.pad(x, ((0, padded - n), (0, 0)))

    b1_2d = b1.reshape(1, d_hid)
    b2_2d = b2.reshape(1, n_cls)

    out = pl.pallas_call(
        _classifier_kernel,
        out_shape=jax.ShapeDtypeStruct((padded, n_cls), x.dtype),
        grid=(n_tiles,),
        in_specs=[
            pl.BlockSpec((tile, d_in), lambda i: (i, 0)),
            pl.BlockSpec((d_in, d_hid), lambda i: (0, 0)),
            pl.BlockSpec((1, d_hid), lambda i: (0, 0)),
            pl.BlockSpec((d_hid, n_cls), lambda i: (0, 0)),
            pl.BlockSpec((1, n_cls), lambda i: (0, 0)),
        ],
        out_specs=pl.BlockSpec((tile, n_cls), lambda i: (i, 0)),
        compiler_params=pltpu.CompilerParams(dimension_semantics=("parallel",)),
    )(x, w1, b1_2d, w2, b2_2d)
    return out[:n]


if __name__ == "__main__":
    key = jax.random.PRNGKey(0)
    k_src, k_tgt, k_w1, k_b1, k_w2, k_b2 = jax.random.split(key, 6)

    FEAT, HIDDEN, CLASSES = 512, 256, 10     # ResNet18 feature dim -> classifier
    N_SRC, N_TGT = 48, 40

    # Stand-in backbone features (see TODO at top).
    src_feat = jax.random.normal(k_src, (N_SRC, FEAT), dtype=jnp.float32)
    tgt_feat = jax.random.normal(k_tgt, (N_TGT, FEAT), dtype=jnp.float32)

    w1 = jax.random.normal(k_w1, (FEAT, HIDDEN), jnp.float32) * 0.05
    b1 = jax.random.normal(k_b1, (HIDDEN,), jnp.float32) * 0.05
    w2 = jax.random.normal(k_w2, (HIDDEN, CLASSES), jnp.float32) * 0.05
    b2 = jax.random.normal(k_b2, (CLASSES,), jnp.float32) * 0.05

    logits = classifier_head(src_feat, w1, b1, w2, b2)
    loss = coral_loss(src_feat, tgt_feat, row_chunk=16)   # 3 reduction steps
    jax.block_until_ready(logits)
    jax.block_until_ready(loss)

    # Pure-JAX references (HIGHEST precision to match the in-kernel f32 MXU path).
    hp = jax.lax.Precision.HIGHEST
    h_ref = jnp.maximum(jnp.dot(src_feat, w1, precision=hp) + b1, 0.0)
    logits_ref = jnp.dot(h_ref, w2, precision=hp) + b2

    def coral_ref(s, t):
        d = s.shape[1]
        sc = jnp.dot(s.T, s, precision=hp) / (s.shape[0] - 1)
        tc = jnp.dot(t.T, t, precision=hp) / (t.shape[0] - 1)
        diff = sc - tc
        return jnp.sum(diff * diff) / (4.0 * d * d)

    loss_ref = coral_ref(src_feat, tgt_feat)

    assert logits.shape == (N_SRC, CLASSES)
    assert jnp.allclose(logits, logits_ref, rtol=1e-3, atol=1e-3), \
        float(jnp.max(jnp.abs(logits - logits_ref)))
    assert jnp.allclose(loss, loss_ref, rtol=1e-3, atol=1e-5), \
        (float(loss), float(loss_ref))

    print("KERNEL_OK")
</pallas_src>

<mosaic_0001>
module attributes {stable_mosaic.version = 11 : i64} {
  func.func @_classifier_kernel(%arg0: i32, %arg1: memref<48x512xf32, #tpu.memory_space<vmem>>, %arg2: memref<512x256xf32, #tpu.memory_space<vmem>>, %arg3: memref<1x256xf32, #tpu.memory_space<vmem>>, %arg4: memref<256x10xf32, #tpu.memory_space<vmem>>, %arg5: memref<1x10xf32, #tpu.memory_space<vmem>>, %arg6: memref<48x10xf32, #tpu.memory_space<vmem>>) attributes {dimension_semantics = [#tpu.dimension_semantics<parallel>], iteration_bounds = array<i64: 1>, scalar_prefetch = 0 : i64, scratch_operands = 0 : i64, tpu.core_type = #tpu.core_type<tc>, window_params = [{transform_indices = @transform_0, window_bounds = array<i64: 48, 512>}, {pipeline_mode = #tpu.pipeline_mode<synchronous>, transform_indices = @transform_1, window_bounds = array<i64: 512, 256>}, {pipeline_mode = #tpu.pipeline_mode<synchronous>, transform_indices = @transform_2, window_bounds = array<i64: 1, 256>}, {pipeline_mode = #tpu.pipeline_mode<synchronous>, transform_indices = @transform_3, window_bounds = array<i64: 256, 10>}, {pipeline_mode = #tpu.pipeline_mode<synchronous>, transform_indices = @transform_4, window_bounds = array<i64: 1, 10>}, {transform_indices = @transform_5, window_bounds = array<i64: 48, 10>}]} {
    %c0 = arith.constant 0 : index
    %c0_0 = arith.constant 0 : index
    %0 = vector.load %arg1[%c0, %c0_0] : memref<48x512xf32, #tpu.memory_space<vmem>>, vector<48x512xf32>
    %c0_1 = arith.constant 0 : index
    %c0_2 = arith.constant 0 : index
    %1 = vector.load %arg2[%c0_1, %c0_2] : memref<512x256xf32, #tpu.memory_space<vmem>>, vector<512x256xf32>
    %cst = arith.constant dense<0.000000e+00> : vector<48x256xf32>
    %2 = tpu.matmul %0, %1, %cst {dimension_numbers = #tpu.dot_dimension_numbers<[1], [0], [0], [1], [0, 0, 1, 1], [], []>} : vector<48x512xf32>, vector<512x256xf32>, vector<48x256xf32> -> vector<48x256xf32>
    %c0_3 = arith.constant 0 : index
    %c0_4 = arith.constant 0 : index
    %3 = vector.load %arg3[%c0_3, %c0_4] : memref<1x256xf32, #tpu.memory_space<vmem>>, vector<1x256xf32>
    %4 = vector.broadcast %3 : vector<1x256xf32> to vector<48x256xf32>
    %5 = arith.addf %2, %4 : vector<48x256xf32>
    %cst_5 = arith.constant 0.000000e+00 : f32
    %6 = vector.broadcast %cst_5 : f32 to vector<48x256xf32>
    %7 = arith.maximumf %5, %6 : vector<48x256xf32>
    %c0_6 = arith.constant 0 : index
    %c0_7 = arith.constant 0 : index
    %8 = vector.load %arg4[%c0_6, %c0_7] : memref<256x10xf32, #tpu.memory_space<vmem>>, vector<256x10xf32>
    %cst_8 = arith.constant dense<0.000000e+00> : vector<48x10xf32>
    %9 = tpu.matmul %7, %8, %cst_8 {dimension_numbers = #tpu.dot_dimension_numbers<[1], [0], [0], [1], [0, 0, 1, 1], [], []>} : vector<48x256xf32>, vector<256x10xf32>, vector<48x10xf32> -> vector<48x10xf32>
    %c0_9 = arith.constant 0 : index
    %c0_10 = arith.constant 0 : index
    %10 = vector.load %arg5[%c0_9, %c0_10] : memref<1x10xf32, #tpu.memory_space<vmem>>, vector<1x10xf32>
    %11 = vector.broadcast %10 : vector<1x10xf32> to vector<48x10xf32>
    %12 = arith.addf %9, %11 : vector<48x10xf32>
    %c0_11 = arith.constant 0 : index
    %c0_12 = arith.constant 0 : index
    %13 = vector.load %arg6[%c0_11, %c0_12] : memref<48x10xf32, #tpu.memory_space<vmem>>, vector<48x10xf32>
    tpu.vector_store %arg6[%c0_11, %c0_12], %12 {strides = array<i32>} : memref<48x10xf32, #tpu.memory_space<vmem>>, vector<48x10xf32>,
    return
  }
  func.func @transform_0(%arg0: i32) -> (i32, i32) {
    %c0_i32 = arith.constant 0 : i32
    %c0_i32_0 = arith.constant 0 : i32
    return %arg0, %c0_i32 : i32, i32
  }
  func.func @transform_1(%arg0: i32) -> (i32, i32) {
    %c0_i32 = arith.constant 0 : i32
    %c0_i32_0 = arith.constant 0 : i32
    %c0_i32_1 = arith.constant 0 : i32
    return %c0_i32, %c0_i32_0 : i32, i32
  }
  func.func @transform_2(%arg0: i32) -> (i32, i32) {
    %c0_i32 = arith.constant 0 : i32
    %c0_i32_0 = arith.constant 0 : i32
    %c0_i32_1 = arith.constant 0 : i32
    return %c0_i32, %c0_i32_0 : i32, i32
  }
  func.func @transform_3(%arg0: i32) -> (i32, i32) {
    %c0_i32 = arith.constant 0 : i32
    %c0_i32_0 = arith.constant 0 : i32
    %c0_i32_1 = arith.constant 0 : i32
    return %c0_i32, %c0_i32_0 : i32, i32
  }
  func.func @transform_4(%arg0: i32) -> (i32, i32) {
    %c0_i32 = arith.constant 0 : i32
    %c0_i32_0 = arith.constant 0 : i32
    %c0_i32_1 = arith.constant 0 : i32
    return %c0_i32, %c0_i32_0 : i32, i32
  }
  func.func @transform_5(%arg0: i32) -> (i32, i32) {
    %c0_i32 = arith.constant 0 : i32
    %c0_i32_0 = arith.constant 0 : i32
    return %arg0, %c0_i32 : i32, i32
  }
}

</mosaic_0001>

<llo_original>
// kernel: tpu_custom_call.1
$region0: #{tpu_custom_call.1}
  #allocation0 [shape = 'u32[]', space=smem, size = 0x4, offset = 0x4, fixed_abs, tag = 'smem constant byte address 0x4 - core index']
  #allocation1 [shape = 'u32[144,128]{1,0:T(1,128)}', space=vmem, size = 0x12000, scoped, tag = 'internal scratch']
  %s0 = inlined_call_operand.vmem [shape: f32[48,512], index: 0, kind: input, shape index: {}]
  %s1 = inlined_call_operand.hbm [shape: f32[512,256], index: 1, kind: input, shape index: {}]
  %s2 = inlined_call_operand.vmem [shape: f32[1,256], index: 2, kind: input, shape index: {}]
  %s3 = inlined_call_operand.vmem [shape: f32[256,10], index: 3, kind: input, shape index: {}]
  %s4 = inlined_call_operand.vmem [shape: f32[1,10], index: 4, kind: input, shape index: {}]
  %s5 = inlined_call_operand.vmem [shape: f32[48,10], index: 5, kind: output, shape index: {}]
  %s6 = sld [smem:[#allocation0]]
  $region34: #{tpu_custom_call.1} parent=0
    _
  %s8 = ssub.s32 1, %s6
  %s9 = scalar_select 0, %s8, %s6
  $region1: #{tpu_custom_call.1} parent=0
    #allocation2 [shape = 'u8[524288]{0}', space=vmem, size = 0x80000, scoped, tag = 'input window, operand 1, single buffered']
    #allocation3 [shape = 's32[1]{0}', space=sflag, size = 0x4, scoped, tag = 'scoped memory for tpu_custom_call.1']
    %10 = vsyncpa [#allocation3], 0
    // Predicated region
    $region2: #{tpu_custom_call.1} parent=1 // pred_check
      _
    $region3: #{tpu_custom_call.1} parent=1 // pred_check_branch
      %12 = sbr.rel (0) target = $region5
    $region4: #{tpu_custom_call.1} parent=1 // pred_region
      _
    $region5: #{tpu_custom_call.1} parent=1 // pred_fallthru
      _
    // Predicated region
    $region6: #{tpu_custom_call.1} parent=1 // pred_check
      _
    $region7: #{tpu_custom_call.1} parent=1 // pred_check_branch
      %14 = sbr.rel (0) target = $region9
    $region8: #{tpu_custom_call.1} parent=1 // pred_region
      %s16 = ssub.s32 16384, 16384
      %17 = vsyncadd [#allocation3], %s16
      %s18 = sshll.u32 [#allocation2], 4
      %s19 = int_to_ptr.vmem [resolvable:$true] %s18
      %24 = dma.hbm_to_vmem [thread:$0]  %s1, 16384, %s19, [#allocation3], 256, 256, 16
    $region9: #{tpu_custom_call.1} parent=1 // pred_fallthru
      _
    // Predicated region
    $region10: #{tpu_custom_call.1} parent=1 // pred_check
      _
    $region11: #{tpu_custom_call.1} parent=1 // pred_check_branch
      %26 = sbr.rel (0) target = $region13
    $region12: #{tpu_custom_call.1} parent=1 // pred_region
      _
    $region13: #{tpu_custom_call.1} parent=1 // pred_fallthru
      _
    // Predicated region
    $region14: #{tpu_custom_call.1} parent=1 // pred_check
      _
    $region15: #{tpu_custom_call.1} parent=1 // pred_check_branch
      %28 = sbr.rel (0) target = $region17
    $region16: #{tpu_custom_call.1} parent=1 // pred_region
      _
    $region17: #{tpu_custom_call.1} parent=1 // pred_fallthru
      _
    // Predicated region
    $region18: #{tpu_custom_call.1} parent=1 // pred_check
      _
    $region19: #{tpu_custom_call.1} parent=1 // pred_check_branch
      %30 = sbr.rel (0) target = $region21
    $region20: #{tpu_custom_call.1} parent=1 // pred_region
      _
    $region21: #{tpu_custom_call.1} parent=1 // pred_fallthru
      _
    // Predicated region
    $region22: #{tpu_custom_call.1} parent=1 // pred_check
      _
    $region23: #{tpu_custom_call.1} parent=1 // pred_check_branch
      %32 = sbr.rel (0) target = $region25
    $region24: #{tpu_custom_call.1} parent=1 // pred_region
      %33 = dma.done [#allocation3], 16384
    $region25: #{tpu_custom_call.1} parent=1 // pred_fallthru
      _
    %v34 = vld [vmem:[%s0] sm:$0xff]
    %v35 = vld [vmem:[%s0 + $0x8] sm:$0xff]
    %v36 = vld [vmem:[%s0 + $0x10] sm:$0xff]
    %v37 = vld [vmem:[%s0 + $0x18] sm:$0xff]
    %v38 = vld [vmem:[%s0 + $0x20] sm:$0xff]
    %v39 = vld [vmem:[%s0 + $0x28] sm:$0xff]
    %v40 = vld [vmem:[%s0 + $0x30] sm:$0xff]
    %v41 = vld [vmem:[%s0 + $0x38] sm:$0xff]
    %v42 = vld [vmem:[%s0 + $0x40] sm:$0xff]
    %v43 = vld [vmem:[%s0 + $0x48] sm:$0xff]
    %v44 = vld [vmem:[%s0 + $0x50] sm:$0xff]
    %v45 = vld [vmem:[%s0 + $0x58] sm:$0xff]
    %v46 = vld [vmem:[%s0 + $0x60] sm:$0xff]
    %v47 = vld [vmem:[%s0 + $0x68] sm:$0xff]
    %v48 = vld [vmem:[%s0 + $0x70] sm:$0xff]
    %v49 = vld [vmem:[%s0 + $0x78] sm:$0xff]
    %v50 = vld [vmem:[%s0 + $0x80] sm:$0xff]
    %v51 = vld [vmem:[%s0 + $0x88] sm:$0xff]
    %v52 = vld [vmem:[%s0 + $0x90] sm:$0xff]
    %v53 = vld [vmem:[%s0 + $0x98] sm:$0xff]
    %v54 = vld [vmem:[%s0 + $0xa0] sm:$0xff]
    %v55 = vld [vmem:[%s0 + $0xa8] sm:$0xff]
    %v56 = vld [vmem:[%s0 + $0xb0] sm:$0xff]
    %v57 = vld [vmem:[%s0 + $0xb8] sm:$0xff]
    %v58 = vld [vmem:[#allocation2] sm:$0xff]
    %v59 = vld [vmem:[#allocation2 + $0x8] sm:$0xff]
    %v60 = vld [vmem:[#allocation2 + $0x10] sm:$0xff]
    %v61 = vld [vmem:[#allocation2 + $0x18] sm:$0xff]
    %v62 = vld [vmem:[#allocation2 + $0x20] sm:$0xff]
    %v63 = vld [vmem:[#allocation2 + $0x28] sm:$0xff]
    %v64 = vld [vmem:[#allocation2 + $0x30] sm:$0xff]
    %v65 = vld [vmem:[#allocation2 + $0x38] sm:$0xff]
    %v66 = vld [vmem:[#allocation2 + $0x40] sm:$0xff]
    %v67 = vld [vmem:[#allocation2 + $0x48] sm:$0xff]
    %v68 = vld [vmem:[#allocation2 + $0x50] sm:$0xff]
    %v69 = vld [vmem:[#allocation2 + $0x58] sm:$0xff]
    %v70 = vld [vmem:[#allocation2 + $0x60] sm:$0xff]
    %v71 = vld [vmem:[#allocation2 + $0x68] sm:$0xff]
    %v72 = vld [vmem:[#allocation2 + $0x70] sm:$0xff]
    %v73 = vld [vmem:[#allocation2 + $0x78] sm:$0xff]
    %v74 = vld [vmem:[#allocation2 + $0x80] sm:$0xff]
    %v75 = vld [vmem:[#allocation2 + $0x88] sm:$0xff]
    %v76 = vld [vmem:[#allocation2 + $0x90] sm:$0xff]
    %v77 = vld [vmem:[#allocation2 + $0x98] sm:$0xff]
    %v78 = vld [vmem:[#allocation2 + $0xa0] sm:$0xff]
    %v79 = vld [vmem:[#allocation2 + $0xa8] sm:$0xff]
    %v80 = vld [vmem:[#allocation2 + $0xb0] sm:$0xff]
    %v81 = vld [vmem:[#allocation2 + $0xb8] sm:$0xff]
    %v82 = vld [vmem:[#allocation2 + $0xc0] sm:$0xff]
    %v83 = vld [vmem:[#allocation2 + $0xc8] sm:$0xff]
    %v84 = vld [vmem:[#allocation2 + $0xd0] sm:$0xff]
    %v85 = vld [vmem:[#allocation2 + $0xd8] sm:$0xff]
    %v86 = vld [vmem:[#allocation2 + $0xe0] sm:$0xff]
    %v87 = vld [vmem:[#allocation2 + $0xe8] sm:$0xff]
    %v88 = vld [vmem:[#allocation2 + $0xf0] sm:$0xff]
    %v89 = vld [vmem:[#allocation2 + $0xf8] sm:$0xff]
    %v90 = vld [vmem:[#allocation2 + $0x100] sm:$0xff]
    %v91 = vld [vmem:[#allocation2 + $0x108] sm:$0xff]
    %v92 = vld [vmem:[#allocation2 + $0x110] sm:$0xff]
    %v93 = vld [vmem:[#allocation2 + $0x118] sm:$0xff]
    %v94 = vld [vmem:[#allocation2 + $0x120] sm:$0xff]
    %v95 = vld [vmem:[#allocation2 + $0x128] sm:$0xff]
    %v96 = vld [vmem:[#allocation2 + $0x130] sm:$0xff]
    %v97 = vld [vmem:[#allocation2 + $0x138] sm:$0xff]
    %v98 = vld [vmem:[#allocation2 + $0x140] sm:$0xff]
    %v99 = vld [vmem:[#allocation2 + $0x148] sm:$0xff]
    %v100 = vld [vmem:[#allocation2 + $0x150] sm:$0xff]
    %v101 = vld [vmem:[#allocation2 + $0x158] sm:$0xff]
    %v102 = vld [vmem:[#allocation2 + $0x160] sm:$0xff]
    %v103 = vld [vmem:[#allocation2 + $0x168] sm:$0xff]
    %v104 = vld [vmem:[#allocation2 + $0x170] sm:$0xff]
    %v105 = vld [vmem:[#allocation2 + $0x178] sm:$0xff]
    %v106 = vld [vmem:[#allocation2 + $0x180] sm:$0xff]
    %v107 = vld [vmem:[#allocation2 + $0x188] sm:$0xff]
    %v108 = vld [vmem:[#allocation2 + $0x190] sm:$0xff]
    %v109 = vld [vmem:[#allocation2 + $0x198] sm:$0xff]
    %v110 = vld [vmem:[#allocation2 + $0x1a0] sm:$0xff]
    %v111 = vld [vmem:[#allocation2 + $0x1a8] sm:$0xff]
    %v112 = vld [vmem:[#allocation2 + $0x1b0] sm:$0xff]
    %v113 = vld [vmem:[#allocation2 + $0x1b8] sm:$0xff]
    %v114 = vld [vmem:[#allocation2 + $0x1c0] sm:$0xff]
    %v115 = vld [vmem:[#allocation2 + $0x1c8] sm:$0xff]
    %v116 = vld [vmem:[#allocation2 + $0x1d0] sm:$0xff]
    %v117 = vld [vmem:[#allocation2 + $0x1d8] sm:$0xff]
    %v118 = vld [vmem:[#allocation2 + $0x1e0] sm:$0xff]
    %v119 = vld [vmem:[#allocation2 + $0x1e8] sm:$0xff]
    %v120 = vld [vmem:[#allocation2 + $0x1f0] sm:$0xff]
    %v121 = vld [vmem:[#allocation2 + $0x1f8] sm:$0xff]
    %v122 = vld [vmem:[#allocation2 + $0x200] sm:$0xff]
    %v123 = vld [vmem:[#allocation2 + $0x208] sm:$0xff]
    %v124 = vld [vmem:[#allocation2 + $0x210] sm:$0xff]
    %v125 = vld [vmem:[#allocation2 + $0x218] sm:$0xff]
    %v126 = vld [vmem:[#allocation2 + $0x220] sm:$0xff]
    %v127 = vld [vmem:[#allocation2 + $0x228] sm:$0xff]
    %v128 = vld [vmem:[#allocation2 + $0x230] sm:$0xff]
    %v129 = vld [vmem:[#allocation2 + $0x238] sm:$0xff]
    %v130 = vld [vmem:[#allocation2 + $0x240] sm:$0xff]
    %v131 = vld [vmem:[#allocation2 + $0x248] sm:$0xff]
    %v132 = vld [vmem:[#allocation2 + $0x250] sm:$0xff]
    %v133 = vld [vmem:[#allocation2 + $0x258] sm:$0xff]
    %v134 = vld [vmem:[#allocation2 + $0x260] sm:$0xff]
    %v135 = vld [vmem:[#allocation2 + $0x268] sm:$0xff]
    %v136 = vld [vmem:[#allocation2 + $0x270] sm:$0xff]
    %v137 = vld [vmem:[#allocation2 + $0x278] sm:$0xff]
    %v138 = vld [vmem:[#allocation2 + $0x280] sm:$0xff]
    %v139 = vld [vmem:[#allocation2 + $0x288] sm:$0xff]
    %v140 = vld [vmem:[#allocation2 + $0x290] sm:$0xff]
    %v141 = vld [vmem:[#allocation2 + $0x298] sm:$0xff]
    %v142 = vld [vmem:[#allocation2 + $0x2a0] sm:$0xff]
    %v143 = vld [vmem:[#allocation2 + $0x2a8] sm:$0xff]
    %v144 = vld [vmem:[#allocation2 + $0x2b0] sm:$0xff]
    %v145 = vld [vmem:[#allocation2 + $0x2b8] sm:$0xff]
    %v146 = vld [vmem:[#allocation2 + $0x2c0] sm:$0xff]
    %v147 = vld [vmem:[#allocation2 + $0x2c8] sm:$0xff]
    %v148 = vld [vmem:[#allocation2 + $0x2d0] sm:$0xff]
    %v149 = vld [vmem:[#allocation2 + $0x2d8] sm:$0xff]
    %v150 = vld [vmem:[#allocation2 + $0x2e0] sm:$0xff]
    %v151 = vld [vmem:[#allocation2 + $0x2e8] sm:$0xff]
    %v152 = vld [vmem:[#allocation2 + $0x2f0] sm:$0xff]
    %v153 = vld [vmem:[#allocation2 + $0x2f8] sm:$0xff]
    %v154 = vld [vmem:[#allocation2 + $0x300] sm:$0xff]
    %v155 = vld [vmem:[#allocation2 + $0x308] sm:$0xff]
    %v156 = vld [vmem:[#allocation2 + $0x310] sm:$0xff]
    %v157 = vld [vmem:[#allocation2 + $0x318] sm:$0xff]
    %v158 = vld [vmem:[#allocation2 + $0x320] sm:$0xff]
    %v159 = vld [vmem:[#allocation2 + $0x328] sm:$0xff]
    %v160 = vld [vmem:[#allocation2 + $0x330] sm:$0xff]
    %v161 = vld [vmem:[#allocation2 + $0x338] sm:$0xff]
    %v162 = vld [vmem:[#allocation2 + $0x340] sm:$0xff]
    %v163 = vld [vmem:[#allocation2 + $0x348] sm:$0xff]
    %v164 = vld [vmem:[#allocation2 + $0x350] sm:$0xff]
    %v165 = vld [vmem:[#allocation2 + $0x358] sm:$0xff]
    %v166 = vld [vmem:[#allocation2 + $0x360] sm:$0xff]
    %v167 = vld [vmem:[#allocation2 + $0x368] sm:$0xff]
    %v168 = vld [vmem:[#allocation2 + $0x370] sm:$0xff]
    %v169 = vld [vmem:[#allocation2 + $0x378] sm:$0xff]
    %v170 = vld [vmem:[#allocation2 + $0x380] sm:$0xff]
    %v171 = vld [vmem:[#allocation2 + $0x388] sm:$0xff]
    %v172 = vld [vmem:[#allocation2 + $0x390] sm:$0xff]
    %v173 = vld [vmem:[#allocation2 + $0x398] sm:$0xff]
    %v174 = vld [vmem:[#allocation2 + $0x3a0] sm:$0xff]
    %v175 = vld [vmem:[#allocation2 + $0x3a8] sm:$0xff]
    %v176 = vld [vmem:[#allocation2 + $0x3b0] sm:$0xff]
    %v177 = vld [vmem:[#allocation2 + $0x3b8] sm:$0xff]
    %v178 = vld [vmem:[#allocation2 + $0x3c0] sm:$0xff]
    %v179 = vld [vmem:[#allocation2 + $0x3c8] sm:$0xff]
    %v180 = vld [vmem:[#allocation2 + $0x3d0] sm:$0xff]
    %v181 = vld [vmem:[#allocation2 + $0x3d8] sm:$0xff]
    %v182 = vld [vmem:[#allocation2 + $0x3e0] sm:$0xff]
    %v183 = vld [vmem:[#allocation2 + $0x3e8] sm:$0xff]
    %v184 = vld [vmem:[#allocation2 + $0x3f0] sm:$0xff]
    %v185 = vld [vmem:[#allocation2 + $0x3f8] sm:$0xff]
    %v186 = vld [vmem:[%s2] sm:$0x3]
    %v188 = vlaneseq
    %v189 = vshrl.u32 %v188, 7
    %v190 = vsub.s32 0, %v189
    %v191 = vrot.slane %v186, %v190
    %v192 = vlaneseq
    %v193 = vshrl.u32 %v192, 7
    %v194 = vsub.s32 1, %v193
    %v195 = vrot.slane %v186, %v194
    %198 = vmatprep.subr.mxu0 %v59
    %199 = vmatpush1.msra.mxu0 %v58
    %200 = vmatprep.subr.mxu0 %v61
    %201 = vmatpush1.msra.mxu0 %v60
    %202 = vmatprep.subr.mxu0 %v63
    %203 = vmatpush1.msra.mxu0 %v62
    %204 = vmatprep.subr.mxu0 %v65
    %205 = vmatpush1.msra.mxu0 %v64
    %206 = vmatprep.subr.mxu0 %v67
    %207 = vmatpush1.msra.mxu0 %v66
    %208 = vmatprep.subr.mxu0 %v69
    %209 = vmatpush1.msra.mxu0 %v68
    %210 = vmatprep.subr.mxu0 %v71
    %211 = vmatpush1.msra.mxu0 %v70
    %212 = vmatprep.subr.mxu0 %v73
    %213 = vmatpush1.msra.mxu0 %v72
    %214 = vmatprep.subr.mxu0 %v75
    %215 = vmatpush1.msra.mxu0 %v74
    %216 = vmatprep.subr.mxu0 %v77
    %217 = vmatpush1.msra.mxu0 %v76
    %218 = vmatprep.subr.mxu0 %v79
    %219 = vmatpush1.msra.mxu0 %v78
    %220 = vmatprep.subr.mxu0 %v81
    %221 = vmatpush1.msra.mxu0 %v80
    %222 = vmatprep.subr.mxu0 %v83
    %223 = vmatpush1.msra.mxu0 %v82
    %224 = vmatprep.subr.mxu0 %v85
    %225 = vmatpush1.msra.mxu0 %v84
    %226 = vmatprep.subr.mxu0 %v87
    %227 = vmatpush1.msra.mxu0 %v86
    %228 = vmatprep.subr.mxu0 %v89
    %229 = vmatpush1.msra.mxu0 %v88
    %230 = vmatprep.subr.mxu0 %v91
    %231 = vmatpush1.msra.mxu0 %v90
    %232 = vmatprep.subr.mxu0 %v93
    %233 = vmatpush1.msra.mxu0 %v92
    %234 = vmatprep.subr.mxu0 %v95
    %235 = vmatpush1.msra.mxu0 %v94
    %236 = vmatprep.subr.mxu0 %v97
    %237 = vmatpush1.msra.mxu0 %v96
    %238 = vmatprep.subr.mxu0 %v99
    %239 = vmatpush1.msra.mxu0 %v98
    %240 = vmatprep.subr.mxu0 %v101
    %241 = vmatpush1.msra.mxu0 %v100
    %242 = vmatprep.subr.mxu0 %v103
    %243 = vmatpush1.msra.mxu0 %v102
    %244 = vmatprep.subr.mxu0 %v105
    %245 = vmatpush1.msra.mxu0 %v104
    %246 = vmatprep.subr.mxu0 %v107
    %247 = vmatpush1.msra.mxu0 %v106
    %248 = vmatprep.subr.mxu0 %v109
    %249 = vmatpush1.msra.mxu0 %v108
    %250 = vmatprep.subr.mxu0 %v111
    %251 = vmatpush1.msra.mxu0 %v110
    %252 = vmatprep.subr.mxu0 %v113
    %253 = vmatpush1.msra.mxu0 %v112
    %254 = vmatprep.subr.mxu0 %v115
    %255 = vmatpush1.msra.mxu0 %v114
    %256 = vmatprep.subr.mxu0 %v117
    %257 = vmatpush1.msra.mxu0 %v116
    %258 = vmatprep.subr.mxu0 %v119
    %259 = vmatpush1.msra.mxu0 %v118
    %260 = vmatprep.subr.mxu0 %v121
    %261 = vmatpush1.msra.mxu0 %v120
    %262 = vmatprep.mubr.f32.mxu0 %v35
    %263 = vmatmul.mubr.f32.gmra.mrb[0].mxu0 %v34
    %v264 = vpop.f32.mrb[0].mxu0
    %v265 = vadd.f32 %v191, %v264
    %v266 = vpop.f32.mrb[0].mxu0
    %v267 = vadd.f32 %v195, %v266
    %268 = vmatprep.mubr.f32.mxu0 %v39
    %269 = vmatmul.mubr.f32.gmra.mrb[0].mxu0 %v38
    %v270 = vpop.f32.mrb[0].mxu0
    %v271 = vadd.f32 %v191, %v270
    %v272 = vpop.f32.mrb[0].mxu0
    %v273 = vadd.f32 %v195, %v272
    %274 = vmatprep.mubr.f32.mxu0 %v43
    %275 = vmatmul.mubr.f32.gmra.mrb[0].mxu0 %v42
    %v276 = vpop.f32.mrb[0].mxu0
    %v277 = vadd.f32 %v191, %v276
    %v278 = vpop.f32.mrb[0].mxu0
    %v279 = vadd.f32 %v195, %v278
    %280 = vmatprep.mubr.f32.mxu0 %v47
    %281 = vmatmul.mubr.f32.gmra.mrb[0].mxu0 %v46
    %v282 = vpop.f32.mrb[0].mxu0
    %v283 = vadd.f32 %v191, %v282
    %v284 = vpop.f32.mrb[0].mxu0
    %v285 = vadd.f32 %v195, %v284
    %286 = vmatprep.mubr.f32.mxu0 %v51
    %287 = vmatmul.mubr.f32.gmra.mrb[0].mxu0 %v50
    %v288 = vpop.f32.mrb[0].mxu0
    %v289 = vadd.f32 %v191, %v288
    %v290 = vpop.f32.mrb[0].mxu0
    %v291 = vadd.f32 %v195, %v290
    %292 = vmatprep.mubr.f32.mxu0 %v55
    %293 = vmatmul.mubr.f32.gmra.mrb[0].mxu0 %v54
    %v294 = vpop.f32.mrb[0].mxu0
    %v295 = vadd.f32 %v191, %v294
    %v296 = vpop.f32.mrb[0].mxu0
    %v297 = vadd.f32 %v195, %v296
    %298 = vdwg.mxu0
    %299 = vmatprep.subr.mxu0 %v123
    %300 = vmatpush1.msra.mxu0 %v122
    %301 = vmatprep.subr.mxu0 %v125
    %302 = vmatpush1.msra.mxu0 %v124
    %303 = vmatprep.subr.mxu0 %v127
    %304 = vmatpush1.msra.mxu0 %v126
    %305 = vmatprep.subr.mxu0 %v129
    %306 = vmatpush1.msra.mxu0 %v128
    %307 = vmatprep.subr.mxu0 %v131
    %308 = vmatpush1.msra.mxu0 %v130
    %309 = vmatprep.subr.mxu0 %v133
    %310 = vmatpush1.msra.mxu0 %v132
    %311 = vmatprep.subr.mxu0 %v135
    %312 = vmatpush1.msra.mxu0 %v134
    %313 = vmatprep.subr.mxu0 %v137
    %314 = vmatpush1.msra.mxu0 %v136
    %315 = vmatprep.subr.mxu0 %v139
    %316 = vmatpush1.msra.mxu0 %v138
    %317 = vmatprep.subr.mxu0 %v141
    %318 = vmatpush1.msra.mxu0 %v140
    %319 = vmatprep.subr.mxu0 %v143
    %320 = vmatpush1.msra.mxu0 %v142
    %321 = vmatprep.subr.mxu0 %v145
    %322 = vmatpush1.msra.mxu0 %v144
    %323 = vmatprep.subr.mxu0 %v147
    %324 = vmatpush1.msra.mxu0 %v146
    %325 = vmatprep.subr.mxu0 %v149
    %326 = vmatpush1.msra.mxu0 %v148
    %327 = vmatprep.subr.mxu0 %v151
    %328 = vmatpush1.msra.mxu0 %v150
    %329 = vmatprep.subr.mxu0 %v153
    %330 = vmatpush1.msra.mxu0 %v152
    %331 = vmatprep.subr.mxu0 %v155
    %332 = vmatpush1.msra.mxu0 %v154
    %333 = vmatprep.subr.mxu0 %v157
    %334 = vmatpush1.msra.mxu0 %v156
    %335 = vmatprep.subr.mxu0 %v159
    %336 = vmatpush1.msra.mxu0 %v158
    %337 = vmatprep.subr.mxu0 %v161
    %338 = vmatpush1.msra.mxu0 %v160
    %339 = vmatprep.subr.mxu0 %v163
    %340 = vmatpush1.msra.mxu0 %v162
    %341 = vmatprep.subr.mxu0 %v165
    %342 = vmatpush1.msra.mxu0 %v164
    %343 = vmatprep.subr.mxu0 %v167
    %344 = vmatpush1.msra.mxu0 %v166
    %345 = vmatprep.subr.mxu0 %v169
    %346 = vmatpush1.msra.mxu0 %v168
    %347 = vmatprep.subr.mxu0 %v171
    %348 = vmatpush1.msra.mxu0 %v170
    %349 = vmatprep.subr.mxu0 %v173
    %350 = vmatpush1.msra.mxu0 %v172
    %351 = vmatprep.subr.mxu0 %v175
    %352 = vmatpush1.msra.mxu0 %v174
    %353 = vmatprep.subr.mxu0 %v177
    %354 = vmatpush1.msra.mxu0 %v176
    %355 = vmatprep.subr.mxu0 %v179
    %356 = vmatpush1.msra.mxu0 %v178
    %357 = vmatprep.subr.mxu0 %v181
    %358 = vmatpush1.msra.mxu0 %v180
    %359 = vmatprep.subr.mxu0 %v183
    %360 = vmatpush1.msra.mxu0 %v182
    %361 = vmatprep.subr.mxu0 %v185
    %362 = vmatpush1.msra.mxu0 %v184
    %363 = vmatprep.mubr.f32.mxu0 %v37
    %364 = vmatmul.mubr.f32.gmra.mrb[0].mxu0 %v36
    %v365 = vpop.f32.mrb[0].mxu0
    %v366 = vadd.f32 %v265, %v365
    %v367 = vpop.f32.mrb[0].mxu0
    %v368 = vadd.f32 %v267, %v367
    %369 = vmatprep.mubr.f32.mxu0 %v41
    %370 = vmatmul.mubr.f32.gmra.mrb[0].mxu0 %v40
    %v371 = vpop.f32.mrb[0].mxu0
    %v372 = vadd.f32 %v271, %v371
    %v373 = vpop.f32.mrb[0].mxu0
    %v374 = vadd.f32 %v273, %v373
    %375 = vmatprep.mubr.f32.mxu0 %v45
    %376 = vmatmul.mubr.f32.gmra.mrb[0].mxu0 %v44
    %v377 = vpop.f32.mrb[0].mxu0
    %v378 = vadd.f32 %v277, %v377
    %v379 = vpop.f32.mrb[0].mxu0
    %v380 = vadd.f32 %v279, %v379
    %381 = vmatprep.mubr.f32.mxu0 %v49
    %382 = vmatmul.mubr.f32.gmra.mrb[0].mxu0 %v48
    %v383 = vpop.f32.mrb[0].mxu0
    %v384 = vadd.f32 %v283, %v383
    %v385 = vpop.f32.mrb[0].mxu0
    %v386 = vadd.f32 %v285, %v385
    %387 = vmatprep.mubr.f32.mxu0 %v53
    %388 = vmatmul.mubr.f32.gmra.mrb[0].mxu0 %v52
    %v389 = vpop.f32.mrb[0].mxu0
    %v390 = vadd.f32 %v289, %v389
    %v391 = vpop.f32.mrb[0].mxu0
    %v392 = vadd.f32 %v291, %v391
    %393 = vmatprep.mubr.f32.mxu0 %v57
    %394 = vmatmul.mubr.f32.gmra.mrb[0].mxu0 %v56
    %v395 = vpop.f32.mrb[0].mxu0
    %v396 = vadd.f32 %v295, %v395
    %v397 = vpop.f32.mrb[0].mxu0
    %v398 = vadd.f32 %v297, %v397
    %399 = vdwg.mxu0
    %v400 = vmax.f32 %v366, 0.0
    %v401 = vmax.f32 %v368, 0.0
    %v402 = vmax.f32 %v372, 0.0
    %v403 = vmax.f32 %v374, 0.0
    %v404 = vmax.f32 %v378, 0.0
    %v405 = vmax.f32 %v380, 0.0
    %v406 = vmax.f32 %v384, 0.0
    %v407 = vmax.f32 %v386, 0.0
    %v408 = vmax.f32 %v390, 0.0
    %v409 = vmax.f32 %v392, 0.0
    %v410 = vmax.f32 %v396, 0.0
    %v411 = vmax.f32 %v398, 0.0
    %v412 = vld [vmem:[%s3] sm:$0xff]
    %v413 = vld [vmem:[%s3 + $0x8] sm:$0xff]
    %v414 = vld [vmem:[%s3 + $0x10] sm:$0xff]
    %v415 = vld [vmem:[%s3 + $0x18] sm:$0xff]
    %v416 = vld [vmem:[%s3 + $0x20] sm:$0xff]
    %v417 = vld [vmem:[%s3 + $0x28] sm:$0xff]
    %v418 = vld [vmem:[%s3 + $0x30] sm:$0xff]
    %v419 = vld [vmem:[%s3 + $0x38] sm:$0xff]
    %v420 = vld [vmem:[%s3 + $0x40] sm:$0xff]
    %v421 = vld [vmem:[%s3 + $0x48] sm:$0xff]
    %v422 = vld [vmem:[%s3 + $0x50] sm:$0xff]
    %v423 = vld [vmem:[%s3 + $0x58] sm:$0xff]
    %v424 = vld [vmem:[%s3 + $0x60] sm:$0xff]
    %v425 = vld [vmem:[%s3 + $0x68] sm:$0xff]
    %v426 = vld [vmem:[%s3 + $0x70] sm:$0xff]
    %v427 = vld [vmem:[%s3 + $0x78] sm:$0xff]
    %v428 = vld [vmem:[%s3 + $0x80] sm:$0xff]
    %v429 = vld [vmem:[%s3 + $0x88] sm:$0xff]
    %v430 = vld [vmem:[%s3 + $0x90] sm:$0xff]
    %v431 = vld [vmem:[%s3 + $0x98] sm:$0xff]
    %v432 = vld [vmem:[%s3 + $0xa0] sm:$0xff]
    %v433 = vld [vmem:[%s3 + $0xa8] sm:$0xff]
    %v434 = vld [vmem:[%s3 + $0xb0] sm:$0xff]
    %v435 = vld [vmem:[%s3 + $0xb8] sm:$0xff]
    %v436 = vld [vmem:[%s3 + $0xc0] sm:$0xff]
    %v437 = vld [vmem:[%s3 + $0xc8] sm:$0xff]
    %v438 = vld [vmem:[%s3 + $0xd0] sm:$0xff]
    %v439 = vld [vmem:[%s3 + $0xd8] sm:$0xff]
    %v440 = vld [vmem:[%s3 + $0xe0] sm:$0xff]
    %v441 = vld [vmem:[%s3 + $0xe8] sm:$0xff]
    %v442 = vld [vmem:[%s3 + $0xf0] sm:$0xff]
    %v443 = vld [vmem:[%s3 + $0xf8] sm:$0xff]
    %v444 = vld [vmem:[%s4] sm:$0x1]
    %v446 = vlaneseq
    %v447 = vshrl.u32 %v446, 7
    %v448 = vsub.s32 0, %v447
    %v449 = vrot.slane %v444, %v448
    %451 = vmatprep.subr.mxu0 0.0
    %452 = vmatpush1.msra.mxu0 %v412
    %453 = vmatprep.subr.mxu0 0.0
    %454 = vmatpush1.msra.mxu0 %v413
    %455 = vmatprep.subr.mxu0 0.0
    %456 = vmatpush1.msra.mxu0 %v414
    %457 = vmatprep.subr.mxu0 0.0
    %458 = vmatpush1.msra.mxu0 %v415
    %459 = vmatprep.subr.mxu0 0.0
    %460 = vmatpush1.msra.mxu0 %v416
    %461 = vmatprep.subr.mxu0 0.0
    %462 = vmatpush1.msra.mxu0 %v417
    %463 = vmatprep.subr.mxu0 0.0
    %464 = vmatpush1.msra.mxu0 %v418
    %465 = vmatprep.subr.mxu0 0.0
    %466 = vmatpush1.msra.mxu0 %v419
    %467 = vmatprep.subr.mxu0 0.0
    %468 = vmatpush1.msra.mxu0 %v420
    %469 = vmatprep.subr.mxu0 0.0
    %470 = vmatpush1.msra.mxu0 %v421
    %471 = vmatprep.subr.mxu0 0.0
    %472 = vmatpush1.msra.mxu0 %v422
    %473 = vmatprep.subr.mxu0 0.0
    %474 = vmatpush1.msra.mxu0 %v423
    %475 = vmatprep.subr.mxu0 0.0
    %476 = vmatpush1.msra.mxu0 %v424
    %477 = vmatprep.subr.mxu0 0.0
    %478 = vmatpush1.msra.mxu0 %v425
    %479 = vmatprep.subr.mxu0 0.0
    %480 = vmatpush1.msra.mxu0 %v426
    %481 = vmatprep.subr.mxu0 0.0
    %482 = vmatpush1.msra.mxu0 %v427
    %483 = vmatprep.subr.mxu0 0.0
    %484 = vmatpush1.msra.mxu0 %v428
    %485 = vmatprep.subr.mxu0 0.0
    %486 = vmatpush1.msra.mxu0 %v429
    %487 = vmatprep.subr.mxu0 0.0
    %488 = vmatpush1.msra.mxu0 %v430
    %489 = vmatprep.subr.mxu0 0.0
    %490 = vmatpush1.msra.mxu0 %v431
    %491 = vmatprep.subr.mxu0 0.0
    %492 = vmatpush1.msra.mxu0 %v432
    %493 = vmatprep.subr.mxu0 0.0
    %494 = vmatpush1.msra.mxu0 %v433
    %495 = vmatprep.subr.mxu0 0.0
    %496 = vmatpush1.msra.mxu0 %v434
    %497 = vmatprep.subr.mxu0 0.0
    %498 = vmatpush1.msra.mxu0 %v435
    %499 = vmatprep.subr.mxu0 0.0
    %500 = vmatpush1.msra.mxu0 %v436
    %501 = vmatprep.subr.mxu0 0.0
    %502 = vmatpush1.msra.mxu0 %v437
    %503 = vmatprep.subr.mxu0 0.0
    %504 = vmatpush1.msra.mxu0 %v438
    %505 = vmatprep.subr.mxu0 0.0
    %506 = vmatpush1.msra.mxu0 %v439
    %507 = vmatprep.subr.mxu0 0.0
    %508 = vmatpush1.msra.mxu0 %v440
    %509 = vmatprep.subr.mxu0 0.0
    %510 = vmatpush1.msra.mxu0 %v441
    %511 = vmatprep.subr.mxu0 0.0
    %512 = vmatpush1.msra.mxu0 %v442
    %513 = vmatprep.subr.mxu0 0.0
    %514 = vmatpush1.msra.mxu0 %v443
    %515 = vmatprep.mubr.f32.mxu0 %v401
    %516 = vmatmul.mubr.f32.gmra.mrb[0].mxu0 %v400
    %v517 = vpop.f32.mrb[0].mxu0
    %v518 = vadd.f32 %v449, %v517
    %v519 = vpop.f32.mrb[0].mxu0
    %520 = vmatprep.mubr.f32.mxu0 %v403
    %521 = vmatmul.mubr.f32.gmra.mrb[0].mxu0 %v402
    %v522 = vpop.f32.mrb[0].mxu0
    %v523 = vadd.f32 %v449, %v522
    %v524 = vpop.f32.mrb[0].mxu0
    %525 = vmatprep.mubr.f32.mxu0 %v405
    %526 = vmatmul.mubr.f32.gmra.mrb[0].mxu0 %v404
    %v527 = vpop.f32.mrb[0].mxu0
    %v528 = vadd.f32 %v449, %v527
    %v529 = vpop.f32.mrb[0].mxu0
    %530 = vmatprep.mubr.f32.mxu0 %v407
    %531 = vmatmul.mubr.f32.gmra.mrb[0].mxu0 %v406
    %v532 = vpop.f32.mrb[0].mxu0
    %v533 = vadd.f32 %v449, %v532
    %v534 = vpop.f32.mrb[0].mxu0
    %535 = vmatprep.mubr.f32.mxu0 %v409
    %536 = vmatmul.mubr.f32.gmra.mrb[0].mxu0 %v408
    %v537 = vpop.f32.mrb[0].mxu0
    %v538 = vadd.f32 %v449, %v537
    %v539 = vpop.f32.mrb[0].mxu0
    %540 = vmatprep.mubr.f32.mxu0 %v411
    %541 = vmatmul.mubr.f32.gmra.mrb[0].mxu0 %v410
    %v542 = vpop.f32.mrb[0].mxu0
    %v543 = vadd.f32 %v449, %v542
    %v544 = vpop.f32.mrb[0].mxu0
    %545 = vdwg.mxu0
    %vm546 = vcmask 80896
    %547 = vst.msk [vmem:[%s5] sm:$0xff] %vm546, %v518
    %548 = vst.msk [vmem:[%s5 + $0x8] sm:$0xff] %vm546, %v523
    %549 = vst.msk [vmem:[%s5 + $0x10] sm:$0xff] %vm546, %v528
    %550 = vst.msk [vmem:[%s5 + $0x18] sm:$0xff] %vm546, %v533
    %551 = vst.msk [vmem:[%s5 + $0x20] sm:$0xff] %vm546, %v538
    %552 = vst.msk [vmem:[%s5 + $0x28] sm:$0xff] %vm546, %v543
    // Predicated region
    $region26: #{tpu_custom_call.1} parent=1 // pred_check
      _
    $region27: #{tpu_custom_call.1} parent=1 // pred_check_branch
      %554 = sbr.rel (0) target = $region29
    $region28: #{tpu_custom_call.1} parent=1 // pred_region
      _
    $region29: #{tpu_custom_call.1} parent=1 // pred_fallthru
      _
    // Predicated region
    $region30: #{tpu_custom_call.1} parent=1 // pred_check
      _
    $region31: #{tpu_custom_call.1} parent=1 // pred_check_branch
      %556 = sbr.rel (0) target = $region33
    $region32: #{tpu_custom_call.1} parent=1 // pred_region
      _
    $region33: #{tpu_custom_call.1} parent=1 // pred_fallthru
      _
    %557 = vsyncpa [#allocation3], 1

</llo_original>
